<compile_context>
chip_gen: v7x
topology: tpu7x:2x2x1
jax: 0.10.0
libtpu: 0.0.40
codegen_flags: <defaults>
</compile_context>

<pallas_src>
import math

import jax
import jax.numpy as jnp
from jax.experimental import pallas as pl
from jax.experimental.pallas import tpu as pltpu

LANE = 128


def _round_up(x, m):
    return ((x + m - 1) // m) * m


def dqn_forward_kernel(x_ref, w1_ref, b1_ref, w2_ref, b2_ref, w3_ref, b3_ref,
                       out_ref):
    # Normalization is already folded into w1 (done once in the wrapper).
    x = x_ref[...]
    h1 = jnp.dot(x, w1_ref[...], preferred_element_type=jnp.float32) + b1_ref[...]
    h1 = jnp.maximum(h1, 0.0)
    h2 = jnp.dot(h1, w2_ref[...], preferred_element_type=jnp.float32) + b2_ref[...]
    h2 = jnp.maximum(h2, 0.0)
    out = jnp.dot(h2, w3_ref[...], preferred_element_type=jnp.float32) + b3_ref[...]
    out_ref[...] = out.astype(out_ref.dtype)


def dqn_forward(state, norm_vec, params, *, block_batch=512):
    """state: [B, input_dims] f32, norm_vec: [input_dims] f32."""
    w1, b1, w2, b2, w3, b3 = params
    B, in_dims = state.shape
    fc1_dims = w1.shape[1]
    fc2_dims = w2.shape[1]
    n_actions = w3.shape[1]

    # Fold the per-feature normalization into fc1: (x / n) @ W1 == x @ (W1 / n[:,None]).
    w1_folded = (w1 / norm_vec[:, None]).astype(jnp.float32)

    # Lane-dense output store: pad fc3 output to a multiple of 128 lanes.
    n_pad = _round_up(n_actions, LANE)
    w3_p = jnp.zeros((fc2_dims, n_pad), jnp.float32).at[:, :n_actions].set(w3)
    b3_p = jnp.zeros((n_pad,), jnp.float32).at[:n_actions].set(b3)

    # Batch tiling: sublane-aligned (multiple of 8), capped at block_batch.
    # VMEM per step (f32, 128-lane padded): double-buffered state tile
    # (2*tb*128*4) + out tile (2*tb*128*4) + resident weights (<64 KiB) +
    # h1/h2 intermediates -> ~2.2 MiB at tb=512, well under v7x's 32 MiB
    # default scoped VMEM.
    tb = min(block_batch, _round_up(B, 8))
    b_pad = _round_up(B, tb)
    if b_pad != B:
        state = jnp.pad(state, ((0, b_pad - B), (0, 0)))

    grid = (b_pad // tb,)

    param_bytes = sum(int(a.size) * 4 for a in (w1_folded, b1, w2, b2, w3_p, b3_p))
    cost = pl.CostEstimate(
        flops=2 * b_pad * (in_dims * fc1_dims + fc1_dims * fc2_dims + fc2_dims * n_pad),
        transcendentals=0,
        bytes_accessed=int(state.size) * 4 + b_pad * n_pad * 4 + param_bytes,
    )

    out_padded = pl.pallas_call(
        dqn_forward_kernel,
        out_shape=jax.ShapeDtypeStruct((b_pad, n_pad), jnp.float32),
        grid=grid,
        in_specs=[
            pl.BlockSpec((tb, in_dims), lambda i: (i, 0)),          # state tile
            pl.BlockSpec((in_dims, fc1_dims), lambda i: (0, 0)),    # w1 (resident)
            pl.BlockSpec((1, fc1_dims), lambda i: (0, 0)),          # b1
            pl.BlockSpec((fc1_dims, fc2_dims), lambda i: (0, 0)),   # w2
            pl.BlockSpec((1, fc2_dims), lambda i: (0, 0)),          # b2
            pl.BlockSpec((fc2_dims, n_pad), lambda i: (0, 0)),      # w3 (padded)
            pl.BlockSpec((1, n_pad), lambda i: (0, 0)),             # b3 (padded)
        ],
        out_specs=pl.BlockSpec((tb, n_pad), lambda i: (i, 0)),
        compiler_params=pltpu.CompilerParams(
            dimension_semantics=("parallel",)),
        cost_estimate=cost,
    )(state, w1_folded, b1.reshape(1, -1), w2, b2.reshape(1, -1),
      w3_p, b3_p.reshape(1, -1))

    return out_padded[:B, :n_actions]


def init_linear(key, fan_in, fan_out):
    """Matches torch.nn.Linear default init: U(-1/sqrt(fan_in), 1/sqrt(fan_in)).
    Weight returned pre-transposed as (fan_in, fan_out)."""
    kw, kb = jax.random.split(key)
    bound = 1.0 / math.sqrt(fan_in)
    w = jax.random.uniform(kw, (fan_in, fan_out), jnp.float32, -bound, bound)
    b = jax.random.uniform(kb, (fan_out,), jnp.float32, -bound, bound)
    return w, b


def make_norm_vec(n_sats, settings):
    entries = []
    for _ in range(n_sats):
        entries.append(86400.0 * settings['time']['duration'] / settings['time']['step_size'])
        entries.append(settings['instrument']['ffor'] / 2.0)
        entries.append(180.0)
        entries.append(180.0)
    entries.append(float(n_sats))
    return jnp.asarray(entries, dtype=jnp.float32)


def reference_forward(state, norm_vec, params):
    w1, b1, w2, b2, w3, b3 = params
    x = state / norm_vec
    x = jnp.maximum(x @ w1 + b1, 0.0)
    x = jnp.maximum(x @ w2 + b2, 0.0)
    return x @ w3 + b3


if __name__ == "__main__":
    # Small, forward-consistent shapes.
    n_sats = 2
    settings = {
        'time': {'duration': 1.0, 'step_size': 10.0},
        'instrument': {'ffor': 60.0},
    }
    input_dims = 4 * n_sats + 1        # 9
    fc1_dims = 32
    fc2_dims = 32
    n_actions = 4
    batch = 8

    key = jax.random.PRNGKey(0)
    k_state, k1, k2, k3 = jax.random.split(key, 4)

    state = jax.random.normal(k_state, (batch, input_dims), jnp.float32) * 10.0
    norm_vec = make_norm_vec(n_sats, settings)

    w1, b1 = init_linear(k1, input_dims, fc1_dims)
    w2, b2 = init_linear(k2, fc1_dims, fc2_dims)
    w3, b3 = init_linear(k3, fc2_dims, n_actions)
    params = (w1, b1, w2, b2, w3, b3)

    actions = dqn_forward(state, norm_vec, params)
    actions = jax.block_until_ready(actions)

    ref = reference_forward(state, norm_vec, params)
    assert actions.shape == (batch, n_actions)
    assert jnp.allclose(actions, ref, atol=2e-5, rtol=1e-5), "mismatch vs JAX reference"

    print("KERNEL_OK")
</pallas_src>

<mosaic_0001>
module attributes {stable_mosaic.version = 11 : i64} {
  func.func @dqn_forward_kernel(%arg0: i32, %arg1: memref<8x9xf32, #tpu.memory_space<vmem>>, %arg2: memref<9x32xf32, #tpu.memory_space<vmem>>, %arg3: memref<1x32xf32, #tpu.memory_space<vmem>>, %arg4: memref<32x32xf32, #tpu.memory_space<vmem>>, %arg5: memref<1x32xf32, #tpu.memory_space<vmem>>, %arg6: memref<32x128xf32, #tpu.memory_space<vmem>>, %arg7: memref<1x128xf32, #tpu.memory_space<vmem>>, %arg8: memref<8x128xf32, #tpu.memory_space<vmem>>) attributes {dimension_semantics = [#tpu.dimension_semantics<parallel>], iteration_bounds = array<i64: 1>, scalar_prefetch = 0 : i64, scratch_operands = 0 : i64, tpu.core_type = #tpu.core_type<tc>, window_params = [{transform_indices = @transform_0, window_bounds = array<i64: 8, 9>}, {pipeline_mode = #tpu.pipeline_mode<synchronous>, transform_indices = @transform_1, window_bounds = array<i64: 9, 32>}, {pipeline_mode = #tpu.pipeline_mode<synchronous>, transform_indices = @transform_2, window_bounds = array<i64: 1, 32>}, {pipeline_mode = #tpu.pipeline_mode<synchronous>, transform_indices = @transform_3, window_bounds = array<i64: 32, 32>}, {pipeline_mode = #tpu.pipeline_mode<synchronous>, transform_indices = @transform_4, window_bounds = array<i64: 1, 32>}, {pipeline_mode = #tpu.pipeline_mode<synchronous>, transform_indices = @transform_5, window_bounds = array<i64: 32, 128>}, {pipeline_mode = #tpu.pipeline_mode<synchronous>, transform_indices = @transform_6, window_bounds = array<i64: 1, 128>}, {transform_indices = @transform_7, window_bounds = array<i64: 8, 128>}]} {
    %c0 = arith.constant 0 : index
    %c0_0 = arith.constant 0 : index
    %0 = vector.load %arg1[%c0, %c0_0] : memref<8x9xf32, #tpu.memory_space<vmem>>, vector<8x9xf32>
    %c0_1 = arith.constant 0 : index
    %c0_2 = arith.constant 0 : index
    %1 = vector.load %arg2[%c0_1, %c0_2] : memref<9x32xf32, #tpu.memory_space<vmem>>, vector<9x32xf32>
    %cst = arith.constant dense<0.000000e+00> : vector<8x32xf32>
    %2 = tpu.matmul %0, %1, %cst {dimension_numbers = #tpu.dot_dimension_numbers<[1], [0], [0], [1], [0, 0, 1, 1], [], []>} : vector<8x9xf32>, vector<9x32xf32>, vector<8x32xf32> -> vector<8x32xf32>
    %c0_3 = arith.constant 0 : index
    %c0_4 = arith.constant 0 : index
    %3 = vector.load %arg3[%c0_3, %c0_4] : memref<1x32xf32, #tpu.memory_space<vmem>>, vector<1x32xf32>
    %4 = vector.broadcast %3 : vector<1x32xf32> to vector<8x32xf32>
    %5 = arith.addf %2, %4 : vector<8x32xf32>
    %cst_5 = arith.constant 0.000000e+00 : f32
    %6 = vector.broadcast %cst_5 : f32 to vector<8x32xf32>
    %7 = arith.maximumf %5, %6 : vector<8x32xf32>
    %c0_6 = arith.constant 0 : index
    %c0_7 = arith.constant 0 : index
    %8 = vector.load %arg4[%c0_6, %c0_7] : memref<32x32xf32, #tpu.memory_space<vmem>>, vector<32x32xf32>
    %cst_8 = arith.constant dense<0.000000e+00> : vector<8x32xf32>
    %9 = tpu.matmul %7, %8, %cst_8 {dimension_numbers = #tpu.dot_dimension_numbers<[1], [0], [0], [1], [0, 0, 1, 1], [], []>} : vector<8x32xf32>, vector<32x32xf32>, vector<8x32xf32> -> vector<8x32xf32>
    %c0_9 = arith.constant 0 : index
    %c0_10 = arith.constant 0 : index
    %10 = vector.load %arg5[%c0_9, %c0_10] : memref<1x32xf32, #tpu.memory_space<vmem>>, vector<1x32xf32>
    %11 = vector.broadcast %10 : vector<1x32xf32> to vector<8x32xf32>
    %12 = arith.addf %9, %11 : vector<8x32xf32>
    %cst_11 = arith.constant 0.000000e+00 : f32
    %13 = vector.broadcast %cst_11 : f32 to vector<8x32xf32>
    %14 = arith.maximumf %12, %13 : vector<8x32xf32>
    %c0_12 = arith.constant 0 : index
    %c0_13 = arith.constant 0 : index
    %15 = vector.load %arg6[%c0_12, %c0_13] : memref<32x128xf32, #tpu.memory_space<vmem>>, vector<32x128xf32>
    %cst_14 = arith.constant dense<0.000000e+00> : vector<8x128xf32>
    %16 = tpu.matmul %14, %15, %cst_14 {dimension_numbers = #tpu.dot_dimension_numbers<[1], [0], [0], [1], [0, 0, 1, 1], [], []>} : vector<8x32xf32>, vector<32x128xf32>, vector<8x128xf32> -> vector<8x128xf32>
    %c0_15 = arith.constant 0 : index
    %c0_16 = arith.constant 0 : index
    %17 = vector.load %arg7[%c0_15, %c0_16] : memref<1x128xf32, #tpu.memory_space<vmem>>, vector<1x128xf32>
    %18 = vector.broadcast %17 : vector<1x128xf32> to vector<8x128xf32>
    %19 = arith.addf %16, %18 : vector<8x128xf32>
    %c0_17 = arith.constant 0 : index
    %c0_18 = arith.constant 0 : index
    %20 = vector.load %arg8[%c0_17, %c0_18] : memref<8x128xf32, #tpu.memory_space<vmem>>, vector<8x128xf32>
    tpu.vector_store %arg8[%c0_17, %c0_18], %19 {strides = array<i32>} : memref<8x128xf32, #tpu.memory_space<vmem>>, vector<8x128xf32>,
    return
  }
  func.func @transform_0(%arg0: i32) -> (i32, i32) {
    %c0_i32 = arith.constant 0 : i32
    %c0_i32_0 = arith.constant 0 : i32
    return %arg0, %c0_i32 : i32, i32
  }
  func.func @transform_1(%arg0: i32) -> (i32, i32) {
    %c0_i32 = arith.constant 0 : i32
    %c0_i32_0 = arith.constant 0 : i32
    %c0_i32_1 = arith.constant 0 : i32
    return %c0_i32, %c0_i32_0 : i32, i32
  }
  func.func @transform_2(%arg0: i32) -> (i32, i32) {
    %c0_i32 = arith.constant 0 : i32
    %c0_i32_0 = arith.constant 0 : i32
    %c0_i32_1 = arith.constant 0 : i32
    return %c0_i32, %c0_i32_0 : i32, i32
  }
  func.func @transform_3(%arg0: i32) -> (i32, i32) {
    %c0_i32 = arith.constant 0 : i32
    %c0_i32_0 = arith.constant 0 : i32
    %c0_i32_1 = arith.constant 0 : i32
    return %c0_i32, %c0_i32_0 : i32, i32
  }
  func.func @transform_4(%arg0: i32) -> (i32, i32) {
    %c0_i32 = arith.constant 0 : i32
    %c0_i32_0 = arith.constant 0 : i32
    %c0_i32_1 = arith.constant 0 : i32
    return %c0_i32, %c0_i32_0 : i32, i32
  }
  func.func @transform_5(%arg0: i32) -> (i32, i32) {
    %c0_i32 = arith.constant 0 : i32
    %c0_i32_0 = arith.constant 0 : i32
    %c0_i32_1 = arith.constant 0 : i32
    return %c0_i32, %c0_i32_0 : i32, i32
  }
  func.func @transform_6(%arg0: i32) -> (i32, i32) {
    %c0_i32 = arith.constant 0 : i32
    %c0_i32_0 = arith.constant 0 : i32
    %c0_i32_1 = arith.constant 0 : i32
    return %c0_i32, %c0_i32_0 : i32, i32
  }
  func.func @transform_7(%arg0: i32) -> (i32, i32) {
    %c0_i32 = arith.constant 0 : i32
    %c0_i32_0 = arith.constant 0 : i32
    return %arg0, %c0_i32 : i32, i32
  }
}

</mosaic_0001>

<llo_original>
// kernel: tpu_custom_call.1
$region0: #{tpu_custom_call.1}
  #allocation0 [shape = 'u32[]', space=smem, size = 0x4, offset = 0x4, fixed_abs, tag = 'smem constant byte address 0x4 - core index']
  #allocation1 [shape = 'u32[144,128]{1,0:T(1,128)}', space=vmem, size = 0x12000, scoped, tag = 'internal scratch']
  %s0 = inlined_call_operand.hbm [shape: f32[8,9], index: 0, kind: input, shape index: {}]
  %s1 = inlined_call_operand.hbm [shape: f32[9,32], index: 1, kind: input, shape index: {}]
  %s2 = inlined_call_operand.vmem [shape: f32[1,32], index: 2, kind: input, shape index: {}]
  %s3 = inlined_call_operand.hbm [shape: f32[32,32], index: 3, kind: input, shape index: {}]
  %s4 = inlined_call_operand.vmem [shape: f32[1,32], index: 4, kind: input, shape index: {}]
  %s5 = inlined_call_operand.hbm [shape: f32[32,128], index: 5, kind: input, shape index: {}]
  %s6 = inlined_call_operand.vmem [shape: f32[1,128], index: 6, kind: input, shape index: {}]
  %s7 = inlined_call_operand.hbm [shape: f32[8,128], index: 7, kind: output, shape index: {}]
  %s8 = sld [smem:[#allocation0]]
  $region54: #{tpu_custom_call.1} parent=0
    _
  %s10 = ssub.s32 1, %s8
  %s11 = scalar_select 0, %s10, %s8
  $region1: #{tpu_custom_call.1} parent=0
    #allocation2 [shape = 'u8[4096]{0}', space=vmem, size = 0x1000, scoped, tag = 'input window, operand 0, single buffered']
    #allocation3 [shape = 's32[1]{0}', space=sflag, size = 0x4, scoped, tag = 'scoped memory for tpu_custom_call.1']
    #allocation4 [shape = 's32[1]{0}', space=sflag, size = 0x4, scoped, tag = 'scoped memory for tpu_custom_call.1']
    #allocation5 [shape = 'u8[8192]{0}', space=vmem, size = 0x2000, scoped, tag = 'input window, operand 1, single buffered']
    #allocation6 [shape = 's32[1]{0}', space=sflag, size = 0x4, scoped, tag = 'scoped memory for tpu_custom_call.1']
    #allocation7 [shape = 'u8[16384]{0}', space=vmem, size = 0x4000, scoped, tag = 'input window, operand 3, single buffered']
    #allocation8 [shape = 'u8[16384]{0}', space=vmem, size = 0x4000, scoped, tag = 'input window, operand 5, single buffered']
    #allocation9 [shape = 's32[1]{0}', space=sflag, size = 0x4, scoped, tag = 'scoped memory for tpu_custom_call.1']
    #allocation10 [shape = 'u8[4096]{0}', space=vmem, size = 0x1000, scoped, tag = 'output window, operand 0, single buffered']
    %12 = vsyncpa [#allocation3], 0
    %13 = vsyncpa [#allocation6], 0
    %14 = vsyncpa [#allocation9], 0
    %15 = vsyncpa [#allocation4], 0
    // Predicated region
    $region2: #{tpu_custom_call.1} parent=1 // pred_check
      _
    $region3: #{tpu_custom_call.1} parent=1 // pred_check_branch
      %17 = sbr.rel (0) target = $region5
    $region4: #{tpu_custom_call.1} parent=1 // pred_region
      %s19 = ssub.s32 128, 128
      %20 = vsyncadd [#allocation3], %s19
      %s22 = sshll.u32 [#allocation2], 4
      %s23 = int_to_ptr.vmem [resolvable:$true] %s22
      %25 = dma.hbm_to_vmem [thread:$0]  %s0, 128, %s23, [#allocation3]
    $region5: #{tpu_custom_call.1} parent=1 // pred_fallthru
      _
    // Predicated region
    $region6: #{tpu_custom_call.1} parent=1 // pred_check
      _
    $region7: #{tpu_custom_call.1} parent=1 // pred_check_branch
      %27 = sbr.rel (0) target = $region9
    $region8: #{tpu_custom_call.1} parent=1 // pred_region
      %s29 = ssub.s32 256, 256
      %30 = vsyncadd [#allocation6], %s29
      %s31 = sshll.u32 [#allocation5], 4
      %s32 = int_to_ptr.vmem [resolvable:$true] %s31
      %37 = dma.hbm_to_vmem [thread:$0]  %s1, 256, %s32, [#allocation6], 128, 128, 8
    $region9: #{tpu_custom_call.1} parent=1 // pred_fallthru
      _
    // Predicated region
    $region10: #{tpu_custom_call.1} parent=1 // pred_check
      _
    $region11: #{tpu_custom_call.1} parent=1 // pred_check_branch
      %39 = sbr.rel (0) target = $region13
    $region12: #{tpu_custom_call.1} parent=1 // pred_region
      _
    $region13: #{tpu_custom_call.1} parent=1 // pred_fallthru
      _
    // Predicated region
    $region14: #{tpu_custom_call.1} parent=1 // pred_check
      _
    $region15: #{tpu_custom_call.1} parent=1 // pred_check_branch
      %41 = sbr.rel (0) target = $region17
    $region16: #{tpu_custom_call.1} parent=1 // pred_region
      %s43 = ssub.s32 512, 512
      %44 = vsyncadd [#allocation6], %s43
      %s45 = sshll.u32 [#allocation7], 4
      %s46 = int_to_ptr.vmem [resolvable:$true] %s45
      %51 = dma.hbm_to_vmem [thread:$0]  %s3, 512, %s46, [#allocation6], 128, 128, 8
    $region17: #{tpu_custom_call.1} parent=1 // pred_fallthru
      _
    // Predicated region
    $region18: #{tpu_custom_call.1} parent=1 // pred_check
      _
    $region19: #{tpu_custom_call.1} parent=1 // pred_check_branch
      %53 = sbr.rel (0) target = $region21
    $region20: #{tpu_custom_call.1} parent=1 // pred_region
      _
    $region21: #{tpu_custom_call.1} parent=1 // pred_fallthru
      _
    // Predicated region
    $region22: #{tpu_custom_call.1} parent=1 // pred_check
      _
    $region23: #{tpu_custom_call.1} parent=1 // pred_check_branch
      %55 = sbr.rel (0) target = $region25
    $region24: #{tpu_custom_call.1} parent=1 // pred_region
      %s57 = ssub.s32 512, 512
      %58 = vsyncadd [#allocation9], %s57
      %s59 = sshll.u32 [#allocation8], 4
      %s60 = int_to_ptr.vmem [resolvable:$true] %s59
      %65 = dma.hbm_to_vmem [thread:$0]  %s5, 512, %s60, [#allocation9], 128, 128, 8
    $region25: #{tpu_custom_call.1} parent=1 // pred_fallthru
      _
    // Predicated region
    $region26: #{tpu_custom_call.1} parent=1 // pred_check
      _
    $region27: #{tpu_custom_call.1} parent=1 // pred_check_branch
      %67 = sbr.rel (0) target = $region29
    $region28: #{tpu_custom_call.1} parent=1 // pred_region
      _
    $region29: #{tpu_custom_call.1} parent=1 // pred_fallthru
      _
    // Predicated region
    $region30: #{tpu_custom_call.1} parent=1 // pred_check
      _
    $region31: #{tpu_custom_call.1} parent=1 // pred_check_branch
      %69 = sbr.rel (0) target = $region33
    $region32: #{tpu_custom_call.1} parent=1 // pred_region
      %70 = dma.done [#allocation3], 128
    $region33: #{tpu_custom_call.1} parent=1 // pred_fallthru
      _
    // Predicated region
    $region34: #{tpu_custom_call.1} parent=1 // pred_check
      _
    $region35: #{tpu_custom_call.1} parent=1 // pred_check_branch
      %72 = sbr.rel (0) target = $region37
    $region36: #{tpu_custom_call.1} parent=1 // pred_region
      %73 = dma.done [#allocation6], 256
    $region37: #{tpu_custom_call.1} parent=1 // pred_fallthru
      _
    // Predicated region
    $region38: #{tpu_custom_call.1} parent=1 // pred_check
      _
    $region39: #{tpu_custom_call.1} parent=1 // pred_check_branch
      %75 = sbr.rel (0) target = $region41
    $region40: #{tpu_custom_call.1} parent=1 // pred_region
      %76 = dma.done [#allocation6], 512
    $region41: #{tpu_custom_call.1} parent=1 // pred_fallthru
      _
    // Predicated region
    $region42: #{tpu_custom_call.1} parent=1 // pred_check
      _
    $region43: #{tpu_custom_call.1} parent=1 // pred_check_branch
      %78 = sbr.rel (0) target = $region45
    $region44: #{tpu_custom_call.1} parent=1 // pred_region
      %79 = dma.done [#allocation9], 512
    $region45: #{tpu_custom_call.1} parent=1 // pred_fallthru
      _
    %v80 = vld [vmem:[#allocation2] sm:$0xff]
    %v81 = vld [vmem:[#allocation5] sm:$0xff]
    %v82 = vld [vmem:[#allocation5 + $0x8] sm:$0x1]
    %v83 = vld [vmem:[%s2] sm:$0x1]
    %v85 = vlaneseq
    %v86 = vshrl.u32 %v85, 7
    %v87 = vsub.s32 0, %v86
    %v88 = vrot.slane %v83, %v87
    %vm90 = vcmask 72704
    %v92 = vsel %vm90, %v80, 0
    %vm94 = vcmask 1040384
    %v96 = vsel %vm94, %v82, 0
    %98 = vmatprep.subr.mxu0 0.0
    %99 = vmatpush1.msra.mxu0 %v81
    %100 = vmatprep.subr.mxu0 0.0
    %101 = vmatpush1.msra.mxu0 %v96
    %102 = vmatprep.subr.mxu0 0.0
    %103 = vmatpush1.msra.mxu0 0.0
    %104 = vmatprep.subr.mxu0 0.0
    %105 = vmatpush1.msra.mxu0 0.0
    %106 = vmatprep.subr.mxu0 0.0
    %107 = vmatpush1.msra.mxu0 0.0
    %108 = vmatprep.subr.mxu0 0.0
    %109 = vmatpush1.msra.mxu0 0.0
    %110 = vmatprep.subr.mxu0 0.0
    %111 = vmatpush1.msra.mxu0 0.0
    %112 = vmatprep.subr.mxu0 0.0
    %113 = vmatpush1.msra.mxu0 0.0
    %114 = vmatprep.subr.mxu0 0.0
    %115 = vmatpush1.msra.mxu0 0.0
    %116 = vmatprep.subr.mxu0 0.0
    %117 = vmatpush1.msra.mxu0 0.0
    %118 = vmatprep.subr.mxu0 0.0
    %119 = vmatpush1.msra.mxu0 0.0
    %120 = vmatprep.subr.mxu0 0.0
    %121 = vmatpush1.msra.mxu0 0.0
    %122 = vmatprep.subr.mxu0 0.0
    %123 = vmatpush1.msra.mxu0 0.0
    %124 = vmatprep.subr.mxu0 0.0
    %125 = vmatpush1.msra.mxu0 0.0
    %126 = vmatprep.subr.mxu0 0.0
    %127 = vmatpush1.msra.mxu0 0.0
    %128 = vmatprep.subr.mxu0 0.0
    %129 = vmatpush1.msra.mxu0 0.0
    %130 = vmatprep.subr.mxu0 0.0
    %131 = vmatpush1.msra.mxu0 0.0
    %132 = vmatprep.subr.mxu0 0.0
    %133 = vmatpush1.msra.mxu0 0.0
    %134 = vmatprep.subr.mxu0 0.0
    %135 = vmatpush1.msra.mxu0 0.0
    %136 = vmatprep.subr.mxu0 0.0
    %137 = vmatpush1.msra.mxu0 0.0
    %138 = vmatprep.subr.mxu0 0.0
    %139 = vmatpush1.msra.mxu0 0.0
    %140 = vmatprep.subr.mxu0 0.0
    %141 = vmatpush1.msra.mxu0 0.0
    %142 = vmatprep.subr.mxu0 0.0
    %143 = vmatpush1.msra.mxu0 0.0
    %144 = vmatprep.subr.mxu0 0.0
    %145 = vmatpush1.msra.mxu0 0.0
    %146 = vmatprep.subr.mxu0 0.0
    %147 = vmatpush1.msra.mxu0 0.0
    %148 = vmatprep.subr.mxu0 0.0
    %149 = vmatpush1.msra.mxu0 0.0
    %150 = vmatprep.subr.mxu0 0.0
    %151 = vmatpush1.msra.mxu0 0.0
    %152 = vmatprep.subr.mxu0 0.0
    %153 = vmatpush1.msra.mxu0 0.0
    %154 = vmatprep.subr.mxu0 0.0
    %155 = vmatpush1.msra.mxu0 0.0
    %156 = vmatprep.subr.mxu0 0.0
    %157 = vmatpush1.msra.mxu0 0.0
    %158 = vmatprep.subr.mxu0 0.0
    %159 = vmatpush1.msra.mxu0 0.0
    %160 = vmatprep.subr.mxu0 0.0
    %161 = vmatpush1.msra.mxu0 0.0
    %162 = vmatprep.mubr.f32.mxu0 0.0
    %163 = vmatmul.mubr.f32.gmra.mrb[0].mxu0 %v92
    %v164 = vpop.f32.mrb[0].mxu0
    %v165 = vadd.f32 %v88, %v164
    %v166 = vpop.f32.mrb[0].mxu0
    %167 = vdwg.mxu0
    %v168 = vmax.f32 %v165, 0.0
    %v169 = vld [vmem:[#allocation7] sm:$0xff]
    %v170 = vld [vmem:[#allocation7 + $0x8] sm:$0xff]
    %v171 = vld [vmem:[#allocation7 + $0x10] sm:$0xff]
    %v172 = vld [vmem:[#allocation7 + $0x18] sm:$0xff]
    %v173 = vld [vmem:[%s4] sm:$0x1]
    %v175 = vlaneseq
    %v176 = vshrl.u32 %v175, 7
    %v177 = vsub.s32 0, %v176
    %v178 = vrot.slane %v173, %v177
    %vm180 = vcmask 261120
    %v182 = vsel %vm180, %v168, 0
    %184 = vmatprep.subr.mxu0 0.0
    %185 = vmatpush1.msra.mxu0 %v169
    %186 = vmatprep.subr.mxu0 0.0
    %187 = vmatpush1.msra.mxu0 %v170
    %188 = vmatprep.subr.mxu0 0.0
    %189 = vmatpush1.msra.mxu0 %v171
    %190 = vmatprep.subr.mxu0 0.0
    %191 = vmatpush1.msra.mxu0 %v172
    %192 = vmatprep.subr.mxu0 0.0
    %193 = vmatpush1.msra.mxu0 0.0
    %194 = vmatprep.subr.mxu0 0.0
    %195 = vmatpush1.msra.mxu0 0.0
    %196 = vmatprep.subr.mxu0 0.0
    %197 = vmatpush1.msra.mxu0 0.0
    %198 = vmatprep.subr.mxu0 0.0
    %199 = vmatpush1.msra.mxu0 0.0
    %200 = vmatprep.subr.mxu0 0.0
    %201 = vmatpush1.msra.mxu0 0.0
    %202 = vmatprep.subr.mxu0 0.0
    %203 = vmatpush1.msra.mxu0 0.0
    %204 = vmatprep.subr.mxu0 0.0
    %205 = vmatpush1.msra.mxu0 0.0
    %206 = vmatprep.subr.mxu0 0.0
    %207 = vmatpush1.msra.mxu0 0.0
    %208 = vmatprep.subr.mxu0 0.0
    %209 = vmatpush1.msra.mxu0 0.0
    %210 = vmatprep.subr.mxu0 0.0
    %211 = vmatpush1.msra.mxu0 0.0
    %212 = vmatprep.subr.mxu0 0.0
    %213 = vmatpush1.msra.mxu0 0.0
    %214 = vmatprep.subr.mxu0 0.0
    %215 = vmatpush1.msra.mxu0 0.0
    %216 = vmatprep.subr.mxu0 0.0
    %217 = vmatpush1.msra.mxu0 0.0
    %218 = vmatprep.subr.mxu0 0.0
    %219 = vmatpush1.msra.mxu0 0.0
    %220 = vmatprep.subr.mxu0 0.0
    %221 = vmatpush1.msra.mxu0 0.0
    %222 = vmatprep.subr.mxu0 0.0
    %223 = vmatpush1.msra.mxu0 0.0
    %224 = vmatprep.subr.mxu0 0.0
    %225 = vmatpush1.msra.mxu0 0.0
    %226 = vmatprep.subr.mxu0 0.0
    %227 = vmatpush1.msra.mxu0 0.0
    %228 = vmatprep.subr.mxu0 0.0
    %229 = vmatpush1.msra.mxu0 0.0
    %230 = vmatprep.subr.mxu0 0.0
    %231 = vmatpush1.msra.mxu0 0.0
    %232 = vmatprep.subr.mxu0 0.0
    %233 = vmatpush1.msra.mxu0 0.0
    %234 = vmatprep.subr.mxu0 0.0
    %235 = vmatpush1.msra.mxu0 0.0
    %236 = vmatprep.subr.mxu0 0.0
    %237 = vmatpush1.msra.mxu0 0.0
    %238 = vmatprep.subr.mxu0 0.0
    %239 = vmatpush1.msra.mxu0 0.0
    %240 = vmatprep.subr.mxu0 0.0
    %241 = vmatpush1.msra.mxu0 0.0
    %242 = vmatprep.subr.mxu0 0.0
    %243 = vmatpush1.msra.mxu0 0.0
    %244 = vmatprep.subr.mxu0 0.0
    %245 = vmatpush1.msra.mxu0 0.0
    %246 = vmatprep.subr.mxu0 0.0
    %247 = vmatpush1.msra.mxu0 0.0
    %248 = vmatprep.mubr.f32.mxu0 0.0
    %249 = vmatmul.mubr.f32.gmra.mrb[0].mxu0 %v182
    %v250 = vpop.f32.mrb[0].mxu0
    %v251 = vadd.f32 %v178, %v250
    %v252 = vpop.f32.mrb[0].mxu0
    %253 = vdwg.mxu0
    %v254 = vmax.f32 %v251, 0.0
    %v255 = vld [vmem:[#allocation8] sm:$0xff]
    %v256 = vld [vmem:[#allocation8 + $0x8] sm:$0xff]
    %v257 = vld [vmem:[#allocation8 + $0x10] sm:$0xff]
    %v258 = vld [vmem:[#allocation8 + $0x18] sm:$0xff]
    %v259 = vld [vmem:[%s6] sm:$0x1]
    %v261 = vlaneseq
    %v262 = vshrl.u32 %v261, 7
    %v263 = vsub.s32 0, %v262
    %v264 = vrot.slane %v259, %v263
    %v267 = vsel %vm180, %v254, 0
    %269 = vmatprep.subr.mxu0 0.0
    %270 = vmatpush1.msra.mxu0 %v255
    %271 = vmatprep.subr.mxu0 0.0
    %272 = vmatpush1.msra.mxu0 %v256
    %273 = vmatprep.subr.mxu0 0.0
    %274 = vmatpush1.msra.mxu0 %v257
    %275 = vmatprep.subr.mxu0 0.0
    %276 = vmatpush1.msra.mxu0 %v258
    %277 = vmatprep.subr.mxu0 0.0
    %278 = vmatpush1.msra.mxu0 0.0
    %279 = vmatprep.subr.mxu0 0.0
    %280 = vmatpush1.msra.mxu0 0.0
    %281 = vmatprep.subr.mxu0 0.0
    %282 = vmatpush1.msra.mxu0 0.0
    %283 = vmatprep.subr.mxu0 0.0
    %284 = vmatpush1.msra.mxu0 0.0
    %285 = vmatprep.subr.mxu0 0.0
    %286 = vmatpush1.msra.mxu0 0.0
    %287 = vmatprep.subr.mxu0 0.0
    %288 = vmatpush1.msra.mxu0 0.0
    %289 = vmatprep.subr.mxu0 0.0
    %290 = vmatpush1.msra.mxu0 0.0
    %291 = vmatprep.subr.mxu0 0.0
    %292 = vmatpush1.msra.mxu0 0.0
    %293 = vmatprep.subr.mxu0 0.0
    %294 = vmatpush1.msra.mxu0 0.0
    %295 = vmatprep.subr.mxu0 0.0
    %296 = vmatpush1.msra.mxu0 0.0
    %297 = vmatprep.subr.mxu0 0.0
    %298 = vmatpush1.msra.mxu0 0.0
    %299 = vmatprep.subr.mxu0 0.0
    %300 = vmatpush1.msra.mxu0 0.0
    %301 = vmatprep.subr.mxu0 0.0
    %302 = vmatpush1.msra.mxu0 0.0
    %303 = vmatprep.subr.mxu0 0.0
    %304 = vmatpush1.msra.mxu0 0.0
    %305 = vmatprep.subr.mxu0 0.0
    %306 = vmatpush1.msra.mxu0 0.0
    %307 = vmatprep.subr.mxu0 0.0
    %308 = vmatpush1.msra.mxu0 0.0
    %309 = vmatprep.subr.mxu0 0.0
    %310 = vmatpush1.msra.mxu0 0.0
    %311 = vmatprep.subr.mxu0 0.0
    %312 = vmatpush1.msra.mxu0 0.0
    %313 = vmatprep.subr.mxu0 0.0
    %314 = vmatpush1.msra.mxu0 0.0
    %315 = vmatprep.subr.mxu0 0.0
    %316 = vmatpush1.msra.mxu0 0.0
    %317 = vmatprep.subr.mxu0 0.0
    %318 = vmatpush1.msra.mxu0 0.0
    %319 = vmatprep.subr.mxu0 0.0
    %320 = vmatpush1.msra.mxu0 0.0
    %321 = vmatprep.subr.mxu0 0.0
    %322 = vmatpush1.msra.mxu0 0.0
    %323 = vmatprep.subr.mxu0 0.0
    %324 = vmatpush1.msra.mxu0 0.0
    %325 = vmatprep.subr.mxu0 0.0
    %326 = vmatpush1.msra.mxu0 0.0
    %327 = vmatprep.subr.mxu0 0.0
    %328 = vmatpush1.msra.mxu0 0.0
    %329 = vmatprep.subr.mxu0 0.0
    %330 = vmatpush1.msra.mxu0 0.0
    %331 = vmatprep.subr.mxu0 0.0
    %332 = vmatpush1.msra.mxu0 0.0
    %333 = vmatprep.mubr.f32.mxu0 0.0
    %334 = vmatmul.mubr.f32.gmra.mrb[0].mxu0 %v267
    %v335 = vpop.f32.mrb[0].mxu0
    %v336 = vadd.f32 %v264, %v335
    %v337 = vpop.f32.mrb[0].mxu0
    %338 = vdwg.mxu0
    %339 = vst [vmem:[#allocation10] sm:$0xff] %v336
    // Predicated region
    $region46: #{tpu_custom_call.1} parent=1 // pred_check
      _
    $region47: #{tpu_custom_call.1} parent=1 // pred_check_branch
      %341 = sbr.rel (0) target = $region49
    $region48: #{tpu_custom_call.1} parent=1 // pred_region
      %s343 = ssub.s32 128, 128
      %344 = vsyncadd [#allocation4], %s343
      %s346 = sshll.u32 [#allocation10], 4
      %s347 = int_to_ptr.vmem [resolvable:$true] %s346
      %349 = dma.vmem_to_hbm [thread:$0]  %s347, 128, %s7, [#allocation4]
    $region49: #{tpu_custom_call.1} parent=1 // pred_fallthru
      _
    // Predicated region
    $region50: #{tpu_custom_call.1} parent=1 // pred_check
      _
    $region51: #{tpu_custom_call.1} parent=1 // pred_check_branch
      %351 = sbr.rel (0) target = $region53
    $region52: #{tpu_custom_call.1} parent=1 // pred_region
      %352 = dma.done [#allocation4], 128
    $region53: #{tpu_custom_call.1} parent=1 // pred_fallthru
      _
    %353 = vsyncpa [#allocation3], 1
    %354 = vsyncpa [#allocation6], 1
    %355 = vsyncpa [#allocation9], 1
    %356 = vsyncpa [#allocation4], 1

</llo_original>
